<compile_context>
chip_gen: v7x
topology: tpu7x:2x2x1
jax: 0.10.0
libtpu: 0.0.40
codegen_flags: <defaults>
</compile_context>

<pallas_src>
import jax
import jax.numpy as jnp
from jax.experimental import pallas as pl
from jax.experimental.pallas import tpu as pltpu


def _round_up(x: int, m: int) -> int:
    return ((x + m - 1) // m) * m


def feature_attention_kernel(x_ref, w_ref, b_ref, o_ref, acc_ref, xg_ref):
    """One (i, j, k) grid step of o = x * sigmoid(x @ W^T + b).

    x_ref : (tm, tk) compute-dtype block of x, indexed by (i, k)  (MXU LHS + gate source)
    w_ref : (tk, tn) compute-dtype block of W^T (in, out layout), indexed by (k, j)
    b_ref : (1, tn)  f32 bias block, indexed by (0, j)
    o_ref : (tm, tn) output block, indexed by (i, j)
    acc_ref : (tm, tn) f32 VMEM accumulator (resident across the k reduction)
    xg_ref  : (tm, tn) compute-dtype VMEM copy of the gate tile, captured at k == j
    """
    j = pl.program_id(1)
    k = pl.program_id(2)

    # Bias is added exactly once per (i, j) output tile.
    @pl.when(k == 0)
    def _init():
        acc_ref[...] = jnp.broadcast_to(b_ref[...], acc_ref.shape)

    # The gate operand x[i, j-tile] equals the matmul LHS tile at k == j (tn == tk by
    # construction), so capture it here instead of streaming x twice from HBM.
    @pl.when(k == j)
    def _capture_gate():
        xg_ref[...] = x_ref[...]

    # MXU contraction: (tm, tk) @ (tk, tn) -> (tm, tn), f32 accumulation.
    prec = jax.lax.Precision.HIGHEST if x_ref.dtype == jnp.float32 else None
    acc_ref[...] += jnp.dot(
        x_ref[...], w_ref[...],
        preferred_element_type=jnp.float32, precision=prec)

    # Finalize after the full K reduction: sigmoid (EUP) + elementwise gate (VPU).
    @pl.when(k == pl.num_programs(2) - 1)
    def _finalize():
        # sigmoid(z) = 0.5 * tanh(z / 2) + 0.5  -> a single EUP op per element.
        gate = 0.5 * jnp.tanh(0.5 * acc_ref[...]) + 0.5
        o_ref[...] = (xg_ref[...].astype(jnp.float32) * gate).astype(o_ref.dtype)


def _pick_tiles(B, D, compute_dtype, out_dtype, vmem_cap_bytes):
    """Choose (tm, td, B_pad, D_pad, vmem_bytes_needed) against the VMEM budget."""
    csize = jnp.dtype(compute_dtype).itemsize
    osize = jnp.dtype(out_dtype).itemsize
    sub_min = 16 if csize == 2 else 8          # dtype-minimal sublane tile

    # Feature tile: lane-dense multiple of 128, as large as practical (<= 1024).
    td = min(1024, _round_up(D, 128))
    D_pad = _round_up(D, td)

    budget = int(0.75 * vmem_cap_bytes)        # leave headroom for compiler scratch

    def vmem_bytes(tm, t):
        return (2 * tm * t * csize             # x LHS blocks (double-buffered)
                + 2 * t * t * csize            # W^T blocks
                + 2 * 8 * t * 4                # bias blocks (sublane-padded)
                + 2 * tm * t * osize           # output blocks
                + tm * t * 4                   # f32 accumulator scratch
                + tm * t * csize)              # captured gate-tile scratch

    # Batch tile: as large as VMEM (and modest padding waste) allows — W is the biggest
    # HBM stream and is re-read B_pad/tm times, so big tm directly cuts HBM traffic.
    tm_full = _round_up(B, sub_min)
    waste_cap = tm_full + max(tm_full // 8, sub_min)
    tm = sub_min
    for cand in sorted({min(tm_full, 2048), 1024, 512, 256, 128, 64, 32, 16, 8},
                       reverse=True):
        if cand < sub_min or cand % sub_min or cand > tm_full:
            continue
        if _round_up(B, cand) > waste_cap:
            continue
        if vmem_bytes(cand, td) <= budget:
            tm = cand
            break
    B_pad = _round_up(B, tm)

    # Megacore (v7x): expose >= 2 tiles along the 'parallel' axes when possible so both
    # TensorCores get work; harmless on single-TC chips.
    if ((B_pad // tm) * (D_pad // td) < 2 and td >= 256
            and (td // 2) % 128 == 0 and D_pad % (td // 2) == 0):
        td //= 2

    return tm, td, B_pad, D_pad, vmem_bytes(tm, td)


def feature_attention(x, weight, bias, *, compute_dtype=jnp.bfloat16):
    """x: (B, D); weight: (D, D) PyTorch (out, in) layout; bias: (D,)."""
    B, D = x.shape
    assert weight.shape == (D, D)
    assert bias.shape == (D,)

    try:
        vmem_cap = int(pltpu.get_tpu_info().vmem_capacity_bytes)
    except Exception:
        vmem_cap = 64 * 1024 * 1024            # v7x per-core VMEM (smallest current gen)

    tm, td, B_pad, D_pad, vmem_need = _pick_tiles(B, D, compute_dtype, x.dtype, vmem_cap)
    tn = tk = td
    # The in-kernel gate-tile capture (k == j) is only valid while tn == tk and both
    # feature axes share the same padding.
    assert tn == tk and D_pad % tn == 0 and D_pad % tk == 0 and B_pad % tm == 0

    # Zero-padding keeps the valid region exact: padded columns contribute 0 to the
    # logits; padded rows/columns only affect outputs that are sliced away.
    if (B_pad, D_pad) != (B, D):
        x_p = jnp.pad(x, ((0, B_pad - B), (0, D_pad - D)))
        w_p = jnp.pad(weight, ((0, D_pad - D), (0, D_pad - D)))
        b_p = jnp.pad(bias, (0, D_pad - D))
    else:
        x_p, w_p, b_p = x, weight, bias

    x_c = x_p.astype(compute_dtype)
    # One-time wrapper transpose to (in, out): the kernel then runs a plain k-major dot
    # with no risk of an in-kernel XLU transpose of the weight tile.
    w_t = w_p.T.astype(compute_dtype)
    b2d = b_p.reshape(1, D_pad).astype(jnp.float32)

    grid = (B_pad // tm, D_pad // tn, D_pad // tk)

    csize = jnp.dtype(compute_dtype).itemsize
    cost = pl.CostEstimate(
        flops=2 * B_pad * D_pad * D_pad,
        transcendentals=B_pad * D_pad,
        bytes_accessed=(
            B_pad * D_pad * csize * (D_pad // tn)       # x re-read once per j tile
            + D_pad * D_pad * csize * (B_pad // tm)     # W re-read once per i tile
            + D_pad * 4                                 # bias
            + B_pad * D_pad * jnp.dtype(x.dtype).itemsize  # output write
        ),
    )

    vmem_limit = int(min(vmem_cap, max(32 * 1024 * 1024, vmem_need + (8 << 20))))

    out_p = pl.pallas_call(
        feature_attention_kernel,
        out_shape=jax.ShapeDtypeStruct((B_pad, D_pad), x.dtype),
        grid_spec=pltpu.PrefetchScalarGridSpec(
            num_scalar_prefetch=0,
            grid=grid,
            in_specs=[
                pl.BlockSpec((tm, tk), lambda i, j, k: (i, k)),   # x (LHS + gate source)
                pl.BlockSpec((tk, tn), lambda i, j, k: (k, j)),   # W^T, (in, out) layout
                pl.BlockSpec((1, tn), lambda i, j, k: (0, j)),    # bias
            ],
            out_specs=pl.BlockSpec((tm, tn), lambda i, j, k: (i, j)),
            scratch_shapes=[
                pltpu.VMEM((tm, tn), jnp.float32),     # f32 accumulator
                pltpu.VMEM((tm, tn), compute_dtype),   # captured gate tile
            ],
        ),
        compiler_params=pltpu.CompilerParams(
            dimension_semantics=("parallel", "parallel", "arbitrary"),
            vmem_limit_bytes=vmem_limit,
        ),
        cost_estimate=cost,
    )(x_c, w_t, b2d)

    if (B_pad, D_pad) != (B, D):
        out_p = out_p[:B, :D]
    return out_p


def feature_attention_ref(x, weight, bias):
    """Pure-JAX reference matching torch: x * sigmoid(x @ W.T + b)."""
    logits = jax.lax.dot_general(
        x, weight,
        dimension_numbers=(((1,), (1,)), ((), ())),
        precision=jax.lax.Precision.HIGHEST,
    ) + bias
    return x * jax.nn.sigmoid(logits)


if __name__ == "__main__":
    key = jax.random.PRNGKey(0)
    k_x, k_w, k_b = jax.random.split(key, 3)

    batch, input_dim = 8, 32

    # Deterministic synthetic parameters (PyTorch nn.Linear shapes: W (D, D), b (D,)).
    x = jax.random.normal(k_x, (batch, input_dim), dtype=jnp.float32)
    bound = 1.0 / (input_dim ** 0.5)
    weight = jax.random.uniform(k_w, (input_dim, input_dim),
                                minval=-bound, maxval=bound, dtype=jnp.float32)
    bias = jax.random.uniform(k_b, (input_dim,),
                              minval=-bound, maxval=bound, dtype=jnp.float32)

    ref = feature_attention_ref(x, weight, bias)

    # Default bf16-operand MXU path (f32 accumulation, f32 sigmoid/gate): fast path.
    out = jax.block_until_ready(feature_attention(x, weight, bias))
    assert out.shape == (batch, input_dim)
    assert jnp.allclose(out, ref, atol=2e-2, rtol=2e-2), "bf16 kernel mismatch vs reference"

    # f32 MXU path (Precision.HIGHEST): tight match to the reference.
    out_f32 = jax.block_until_ready(
        feature_attention(x, weight, bias, compute_dtype=jnp.float32))
    assert jnp.allclose(out_f32, ref, atol=1e-5, rtol=1e-5), "f32 kernel mismatch vs reference"

    print("KERNEL_OK")
</pallas_src>

<mosaic_0001>
module attributes {stable_mosaic.version = 11 : i64} {
  func.func @feature_attention_kernel(%arg0: i32, %arg1: i32, %arg2: i32, %arg3: memref<16x128xbf16, #tpu.memory_space<vmem>>, %arg4: memref<128x128xbf16, #tpu.memory_space<vmem>>, %arg5: memref<1x128xf32, #tpu.memory_space<vmem>>, %arg6: memref<16x128xf32, #tpu.memory_space<vmem>>, %arg7: memref<16x128xf32, #tpu.memory_space<vmem>>, %arg8: memref<16x128xbf16, #tpu.memory_space<vmem>>) attributes {dimension_semantics = [#tpu.dimension_semantics<parallel>, #tpu.dimension_semantics<parallel>, #tpu.dimension_semantics<arbitrary>], iteration_bounds = array<i64: 1, 1, 1>, scalar_prefetch = 0 : i64, scratch_operands = 2 : i64, tpu.core_type = #tpu.core_type<tc>, window_params = [{transform_indices = @transform_0, window_bounds = array<i64: 16, 128>}, {transform_indices = @transform_1, window_bounds = array<i64: 128, 128>}, {transform_indices = @transform_2, window_bounds = array<i64: 1, 128>}, {transform_indices = @transform_3, window_bounds = array<i64: 16, 128>}]} {
    %c0_i32 = arith.constant 0 : i32
    %0 = arith.cmpi eq, %arg2, %c0_i32 : i32
    %1 = arith.extui %0 : i1 to i32
    %c0_i32_0 = arith.constant 0 : i32
    %2 = arith.cmpi ne, %1, %c0_i32_0 : i32
    scf.if %2 {
      %c0_11 = arith.constant 0 : index
      %c0_12 = arith.constant 0 : index
      %15 = vector.load %arg5[%c0_11, %c0_12] : memref<1x128xf32, #tpu.memory_space<vmem>>, vector<1x128xf32>
      %16 = vector.shape_cast %15 : vector<1x128xf32> to vector<1x128xf32>
      %17 = vector.broadcast %16 : vector<1x128xf32> to vector<16x128xf32>
      %c0_13 = arith.constant 0 : index
      %c0_14 = arith.constant 0 : index
      %18 = vector.load %arg7[%c0_13, %c0_14] : memref<16x128xf32, #tpu.memory_space<vmem>>, vector<16x128xf32>
      tpu.vector_store %arg7[%c0_13, %c0_14], %17 {strides = array<i32>} : memref<16x128xf32, #tpu.memory_space<vmem>>, vector<16x128xf32>,
    } else {
    }
    %3 = arith.cmpi eq, %arg2, %arg1 : i32
    %4 = arith.extui %3 : i1 to i32
    %c0_i32_1 = arith.constant 0 : i32
    %5 = arith.cmpi ne, %4, %c0_i32_1 : i32
    scf.if %5 {
      %c0_11 = arith.constant 0 : index
      %c0_12 = arith.constant 0 : index
      %15 = vector.load %arg3[%c0_11, %c0_12] : memref<16x128xbf16, #tpu.memory_space<vmem>>, vector<16x128xbf16>
      %c0_13 = arith.constant 0 : index
      %c0_14 = arith.constant 0 : index
      %16 = vector.load %arg8[%c0_13, %c0_14] : memref<16x128xbf16, #tpu.memory_space<vmem>>, vector<16x128xbf16>
      tpu.vector_store %arg8[%c0_13, %c0_14], %15 {strides = array<i32>} : memref<16x128xbf16, #tpu.memory_space<vmem>>, vector<16x128xbf16>,
    } else {
    }
    %c0 = arith.constant 0 : index
    %c0_2 = arith.constant 0 : index
    %6 = vector.load %arg7[%c0, %c0_2] : memref<16x128xf32, #tpu.memory_space<vmem>>, vector<16x128xf32>
    %c0_3 = arith.constant 0 : index
    %c0_4 = arith.constant 0 : index
    %7 = vector.load %arg3[%c0_3, %c0_4] : memref<16x128xbf16, #tpu.memory_space<vmem>>, vector<16x128xbf16>
    %c0_5 = arith.constant 0 : index
    %c0_6 = arith.constant 0 : index
    %8 = vector.load %arg4[%c0_5, %c0_6] : memref<128x128xbf16, #tpu.memory_space<vmem>>, vector<128x128xbf16>
    %cst = arith.constant dense<0.000000e+00> : vector<16x128xf32>
    %9 = tpu.matmul %7, %8, %cst {dimension_numbers = #tpu.dot_dimension_numbers<[1], [0], [0], [1], [0, 0, 1, 1], [], []>} : vector<16x128xbf16>, vector<128x128xbf16>, vector<16x128xf32> -> vector<16x128xf32>
    %10 = arith.addf %6, %9 : vector<16x128xf32>
    %c0_7 = arith.constant 0 : index
    %c0_8 = arith.constant 0 : index
    %11 = vector.load %arg7[%c0_7, %c0_8] : memref<16x128xf32, #tpu.memory_space<vmem>>, vector<16x128xf32>
    tpu.vector_store %arg7[%c0_7, %c0_8], %10 {strides = array<i32>} : memref<16x128xf32, #tpu.memory_space<vmem>>, vector<16x128xf32>,
    %c0_i32_9 = arith.constant 0 : i32
    %12 = arith.cmpi eq, %arg2, %c0_i32_9 : i32
    %13 = arith.extui %12 : i1 to i32
    %c0_i32_10 = arith.constant 0 : i32
    %14 = arith.cmpi ne, %13, %c0_i32_10 : i32
    scf.if %14 {
      %c0_11 = arith.constant 0 : index
      %c0_12 = arith.constant 0 : index
      %15 = vector.load %arg7[%c0_11, %c0_12] : memref<16x128xf32, #tpu.memory_space<vmem>>, vector<16x128xf32>
      %cst_13 = arith.constant 5.000000e-01 : f32
      %16 = vector.broadcast %cst_13 : f32 to vector<16x128xf32>
      %17 = arith.mulf %16, %15 : vector<16x128xf32>
      %18 = math.tanh %17 : vector<16x128xf32>
      %cst_14 = arith.constant 5.000000e-01 : f32
      %19 = vector.broadcast %cst_14 : f32 to vector<16x128xf32>
      %20 = arith.mulf %19, %18 : vector<16x128xf32>
      %cst_15 = arith.constant 5.000000e-01 : f32
      %21 = vector.broadcast %cst_15 : f32 to vector<16x128xf32>
      %22 = arith.addf %20, %21 : vector<16x128xf32>
      %c0_16 = arith.constant 0 : index
      %c0_17 = arith.constant 0 : index
      %23 = vector.load %arg8[%c0_16, %c0_17] : memref<16x128xbf16, #tpu.memory_space<vmem>>, vector<16x128xbf16>
      %24 = arith.extf %23 : vector<16x128xbf16> to vector<16x128xf32>
      %25 = arith.mulf %24, %22 : vector<16x128xf32>
      %c0_18 = arith.constant 0 : index
      %c0_19 = arith.constant 0 : index
      %26 = vector.load %arg6[%c0_18, %c0_19] : memref<16x128xf32, #tpu.memory_space<vmem>>, vector<16x128xf32>
      tpu.vector_store %arg6[%c0_18, %c0_19], %25 {strides = array<i32>} : memref<16x128xf32, #tpu.memory_space<vmem>>, vector<16x128xf32>,
    } else {
    }
    return
  }
  func.func @transform_0(%arg0: i32, %arg1: i32, %arg2: i32) -> (i32, i32) {
    %c0_i32 = arith.constant 0 : i32
    return %arg0, %arg2 : i32, i32
  }
  func.func @transform_1(%arg0: i32, %arg1: i32, %arg2: i32) -> (i32, i32) {
    %c0_i32 = arith.constant 0 : i32
    return %arg2, %arg1 : i32, i32
  }
  func.func @transform_2(%arg0: i32, %arg1: i32, %arg2: i32) -> (i32, i32) {
    %c0_i32 = arith.constant 0 : i32
    %c0_i32_0 = arith.constant 0 : i32
    return %c0_i32, %arg1 : i32, i32
  }
  func.func @transform_3(%arg0: i32, %arg1: i32, %arg2: i32) -> (i32, i32) {
    %c0_i32 = arith.constant 0 : i32
    return %arg0, %arg1 : i32, i32
  }
}

</mosaic_0001>

<llo_original>
// kernel: tpu_custom_call.1
$region0: #{tpu_custom_call.1}
  #allocation0 [shape = 'u32[]', space=smem, size = 0x4, offset = 0x4, fixed_abs, tag = 'smem constant byte address 0x4 - core index']
  #allocation1 [shape = 'u32[144,128]{1,0:T(1,128)}', space=vmem, size = 0x12000, scoped, tag = 'internal scratch']
  #allocation2 [shape = 'f32[16,128]{1,0:T(8,128)}', space=vmem, size = 0x2000, scoped, tag = 'scratch operand']
  #allocation3 [shape = 'bf16[16,128]{1,0:T(16,128)(2,1)}', space=vmem, size = 0x1000, scoped, tag = 'scratch operand']
  %s0 = inlined_call_operand.hbm [shape: bf16[16,128], index: 0, kind: input, shape index: {}]
  %s1 = inlined_call_operand.hbm [shape: bf16[128,128], index: 1, kind: input, shape index: {}]
  %s2 = inlined_call_operand.vmem [shape: f32[1,128], index: 2, kind: input, shape index: {}]
  %s3 = inlined_call_operand.hbm [shape: f32[16,128], index: 3, kind: output, shape index: {}]
  %s4 = sld [smem:[#allocation0]]
  $region42: #{tpu_custom_call.1} parent=0
    _
  %s6 = ssub.s32 1, %s4
  %s7 = scalar_select 0, %s6, %s4
  $region1: #{tpu_custom_call.1} parent=0
    #allocation4 [shape = 'u8[4096]{0}', space=vmem, size = 0x1000, scoped, tag = 'input window, operand 0, single buffered']
    #allocation5 [shape = 's32[1]{0}', space=sflag, size = 0x4, scoped, tag = 'scoped memory for tpu_custom_call.1']
    #allocation6 [shape = 's32[1]{0}', space=sflag, size = 0x4, scoped, tag = 'scoped memory for tpu_custom_call.1']
    #allocation7 [shape = 'u8[32768]{0}', space=vmem, size = 0x8000, scoped, tag = 'input window, operand 1, single buffered']
    #allocation8 [shape = 's32[1]{0}', space=sflag, size = 0x4, scoped, tag = 'scoped memory for tpu_custom_call.1']
    #allocation9 [shape = 'u8[8192]{0}', space=vmem, size = 0x2000, scoped, tag = 'output window, operand 0, single buffered']
    %8 = vsyncpa [#allocation5], 0
    %9 = vsyncpa [#allocation8], 0
    %10 = vsyncpa [#allocation6], 0
    // Predicated region
    $region2: #{tpu_custom_call.1} parent=1 // pred_check
      _
    $region3: #{tpu_custom_call.1} parent=1 // pred_check_branch
      %12 = sbr.rel (0) target = $region5
    $region4: #{tpu_custom_call.1} parent=1 // pred_region
      %s14 = ssub.s32 128, 128
      %15 = vsyncadd [#allocation5], %s14
      %s16 = sshll.u32 [#allocation4], 4
      %s17 = int_to_ptr.vmem [resolvable:$true] %s16
      %22 = dma.hbm_to_vmem [thread:$0]  %s0, 128, %s17, [#allocation5], 64, 64, 4
    $region5: #{tpu_custom_call.1} parent=1 // pred_fallthru
      _
    // Predicated region
    $region6: #{tpu_custom_call.1} parent=1 // pred_check
      _
    $region7: #{tpu_custom_call.1} parent=1 // pred_check_branch
      %24 = sbr.rel (0) target = $region9
    $region8: #{tpu_custom_call.1} parent=1 // pred_region
      %s26 = ssub.s32 1024, 1024
      %27 = vsyncadd [#allocation8], %s26
      %s28 = sshll.u32 [#allocation7], 4
      %s29 = int_to_ptr.vmem [resolvable:$true] %s28
      %34 = dma.hbm_to_vmem [thread:$0]  %s1, 1024, %s29, [#allocation8], 64, 64, 4
    $region9: #{tpu_custom_call.1} parent=1 // pred_fallthru
      _
    // Predicated region
    $region10: #{tpu_custom_call.1} parent=1 // pred_check
      _
    $region11: #{tpu_custom_call.1} parent=1 // pred_check_branch
      %36 = sbr.rel (0) target = $region13
    $region12: #{tpu_custom_call.1} parent=1 // pred_region
      _
    $region13: #{tpu_custom_call.1} parent=1 // pred_fallthru
      _
    // Predicated region
    $region14: #{tpu_custom_call.1} parent=1 // pred_check
      _
    $region15: #{tpu_custom_call.1} parent=1 // pred_check_branch
      %38 = sbr.rel (0) target = $region17
    $region16: #{tpu_custom_call.1} parent=1 // pred_region
      %39 = dma.done [#allocation5], 128
    $region17: #{tpu_custom_call.1} parent=1 // pred_fallthru
      _
    // Predicated region
    $region18: #{tpu_custom_call.1} parent=1 // pred_check
      _
    $region19: #{tpu_custom_call.1} parent=1 // pred_check_branch
      %41 = sbr.rel (0) target = $region21
    $region20: #{tpu_custom_call.1} parent=1 // pred_region
      %42 = dma.done [#allocation8], 1024
    $region21: #{tpu_custom_call.1} parent=1 // pred_fallthru
      _
    %p44 = scmp.eq.s32.totalorder 0, 0
    // Predicated region
    $region22: #{tpu_custom_call.1} parent=1 // pred_check
      %p45 = pneg %p44
    $region23: #{tpu_custom_call.1} parent=1 // pred_check_branch
      %47 = sbr.rel (%p45) target = $region25
    $region24: #{tpu_custom_call.1} parent=1 // pred_region
      %v48 = vld [vmem:[%s2] sm:$0x1]
      %v50 = vlaneseq
      %v51 = vshrl.u32 %v50, 7
      %v52 = vsub.s32 0, %v51
      %v53 = vrot.slane %v48, %v52
      %55 = vst [vmem:[#allocation2] sm:$0xff] %v53
      %56 = vst [vmem:[#allocation2 + $0x8] sm:$0xff] %v53
    $region25: #{tpu_custom_call.1} parent=1 // pred_fallthru
      _
    %p57 = scmp.eq.s32.totalorder 0, 0
    // Predicated region
    $region26: #{tpu_custom_call.1} parent=1 // pred_check
      %p58 = pneg %p57
    $region27: #{tpu_custom_call.1} parent=1 // pred_check_branch
      %60 = sbr.rel (%p58) target = $region29
    $region28: #{tpu_custom_call.1} parent=1 // pred_region
      %v61 = vld [vmem:[#allocation4] sm:$0xf]
      %v62 = vld [vmem:[#allocation4 + $0x4] sm:$0xf]
      %v65 = vunpack.c.l.b16 %v61
      %v66 = vunpack.c.l.b16 %v62
      %v67 = vpack.c.b16 %v66, %v65
      %69 = vst [vmem:[#allocation3] sm:$0xff] %v67
    $region29: #{tpu_custom_call.1} parent=1 // pred_fallthru
      _
    %v70 = vld [vmem:[#allocation2] sm:$0xff]
    %v71 = vld [vmem:[#allocation2 + $0x8] sm:$0xff]
    %v72 = vld [vmem:[#allocation4] sm:$0xf]
    %v73 = vld [vmem:[#allocation4 + $0x4] sm:$0xf]
    %v74 = vld [vmem:[#allocation7] sm:$0xf]
    %v75 = vld [vmem:[#allocation7 + $0x4] sm:$0xf]
    %v76 = vld [vmem:[#allocation7 + $0x8] sm:$0xf]
    %v77 = vld [vmem:[#allocation7 + $0xc] sm:$0xf]
    %v78 = vld [vmem:[#allocation7 + $0x10] sm:$0xf]
    %v79 = vld [vmem:[#allocation7 + $0x14] sm:$0xf]
    %v80 = vld [vmem:[#allocation7 + $0x18] sm:$0xf]
    %v81 = vld [vmem:[#allocation7 + $0x1c] sm:$0xf]
    %v82 = vld [vmem:[#allocation7 + $0x20] sm:$0xf]
    %v83 = vld [vmem:[#allocation7 + $0x24] sm:$0xf]
    %v84 = vld [vmem:[#allocation7 + $0x28] sm:$0xf]
    %v85 = vld [vmem:[#allocation7 + $0x2c] sm:$0xf]
    %v86 = vld [vmem:[#allocation7 + $0x30] sm:$0xf]
    %v87 = vld [vmem:[#allocation7 + $0x34] sm:$0xf]
    %v88 = vld [vmem:[#allocation7 + $0x38] sm:$0xf]
    %v89 = vld [vmem:[#allocation7 + $0x3c] sm:$0xf]
    %v92 = vunpack.c.l.b16 %v72
    %v93 = vunpack.c.l.b16 %v73
    %v94 = vpack.c.b16 %v93, %v92
    %v112 = vunpack.c.l.b16 %v74
    %v113 = vunpack.c.l.b16 %v75
    %v114 = vunpack.c.l.b16 %v76
    %v115 = vunpack.c.l.b16 %v77
    %v116 = vunpack.c.l.b16 %v78
    %v117 = vunpack.c.l.b16 %v79
    %v118 = vunpack.c.l.b16 %v80
    %v119 = vunpack.c.l.b16 %v81
    %v120 = vunpack.c.l.b16 %v82
    %v121 = vunpack.c.l.b16 %v83
    %v122 = vunpack.c.l.b16 %v84
    %v123 = vunpack.c.l.b16 %v85
    %v124 = vunpack.c.l.b16 %v86
    %v125 = vunpack.c.l.b16 %v87
    %v126 = vunpack.c.l.b16 %v88
    %v127 = vunpack.c.l.b16 %v89
    %v128 = vpack.c.b16 %v113, %v112
    %v129 = vpack.c.b16 %v115, %v114
    %v130 = vpack.c.b16 %v117, %v116
    %v131 = vpack.c.b16 %v119, %v118
    %v132 = vpack.c.b16 %v121, %v120
    %v133 = vpack.c.b16 %v123, %v122
    %v134 = vpack.c.b16 %v125, %v124
    %v135 = vpack.c.b16 %v127, %v126
    %144 = vmatprep.subr.bf16.mxu0 0
    %145 = vmatpush1.bf16.msra.mxu0 %v128
    %146 = vmatprep.subr.bf16.mxu0 0
    %147 = vmatpush1.bf16.msra.mxu0 %v129
    %148 = vmatprep.subr.bf16.mxu0 0
    %149 = vmatpush1.bf16.msra.mxu0 %v130
    %150 = vmatprep.subr.bf16.mxu0 0
    %151 = vmatpush1.bf16.msra.mxu0 %v131
    %152 = vmatprep.subr.bf16.mxu0 0
    %153 = vmatpush1.bf16.msra.mxu0 %v132
    %154 = vmatprep.subr.bf16.mxu0 0
    %155 = vmatpush1.bf16.msra.mxu0 %v133
    %156 = vmatprep.subr.bf16.mxu0 0
    %157 = vmatpush1.bf16.msra.mxu0 %v134
    %158 = vmatprep.subr.bf16.mxu0 0
    %159 = vmatpush1.bf16.msra.mxu0 %v135
    %160 = vmatprep.subr.bf16.mxu0 0
    %161 = vmatpush1.bf16.msra.mxu0 0
    %162 = vmatprep.subr.bf16.mxu0 0
    %163 = vmatpush1.bf16.msra.mxu0 0
    %164 = vmatprep.subr.bf16.mxu0 0
    %165 = vmatpush1.bf16.msra.mxu0 0
    %166 = vmatprep.subr.bf16.mxu0 0
    %167 = vmatpush1.bf16.msra.mxu0 0
    %168 = vmatprep.subr.bf16.mxu0 0
    %169 = vmatpush1.bf16.msra.mxu0 0
    %170 = vmatprep.subr.bf16.mxu0 0
    %171 = vmatpush1.bf16.msra.mxu0 0
    %172 = vmatprep.subr.bf16.mxu0 0
    %173 = vmatpush1.bf16.msra.mxu0 0
    %174 = vmatprep.subr.bf16.mxu0 0
    %175 = vmatpush1.bf16.msra.mxu0 0
    %176 = vmatprep.mubr.bf16.mxu0 0
    %177 = vmatmul.mubr.bf16.gmra.mrb[0].mxu0 %v94
    %v178 = vpop.f32.mrb[0].mxu0
    %v179 = vadd.f32 0.0, %v178
    %v180 = vpop.f32.mrb[0].mxu0
    %v181 = vpop.f32.mrb[0].mxu0
    %v182 = vadd.f32 0.0, %v181
    %v183 = vpop.f32.mrb[0].mxu0
    %184 = vdwg.mxu0
    %v185 = vadd.f32 %v70, %v179
    %v186 = vadd.f32 %v71, %v182
    %187 = vst [vmem:[#allocation2] sm:$0xff] %v185
    %188 = vst [vmem:[#allocation2 + $0x8] sm:$0xff] %v186
    // Predicated region
    $region30: #{tpu_custom_call.1} parent=1 // pred_check
      %p189 = pneg %p44
    $region31: #{tpu_custom_call.1} parent=1 // pred_check_branch
      %191 = sbr.rel (%p189) target = $region33
    $region32: #{tpu_custom_call.1} parent=1 // pred_region
      %v192 = vld [vmem:[#allocation2] sm:$0xff]
      %v193 = vld [vmem:[#allocation2 + $0x8] sm:$0xff]
      %v194 = vmul.f32 %v192, 0.5
      %v195 = vmul.f32 %v193, 0.5
      %v196 = vtanh.pop %v194
      %v197 = vtanh.pop %v195
      %v198 = vmul.f32 %v196, 0.5
      %v199 = vmul.f32 %v197, 0.5
      %v200 = vadd.f32 %v198, 0.5
      %v201 = vadd.f32 %v199, 0.5
      %v202 = vld [vmem:[#allocation3] sm:$0xff]
      %v203 = vunpack.c.l.bf16 %v202
      %v204 = vunpack.c.h.bf16 %v202
      %v205 = vmul.f32 %v203, %v200
      %v206 = vmul.f32 %v204, %v201
      %207 = vst [vmem:[#allocation9] sm:$0xff] %v205
      %208 = vst [vmem:[#allocation9 + $0x8] sm:$0xff] %v206
    $region33: #{tpu_custom_call.1} parent=1 // pred_fallthru
      _
    // Predicated region
    $region34: #{tpu_custom_call.1} parent=1 // pred_check
      _
    $region35: #{tpu_custom_call.1} parent=1 // pred_check_branch
      %210 = sbr.rel (0) target = $region37
    $region36: #{tpu_custom_call.1} parent=1 // pred_region
      %s212 = ssub.s32 256, 256
      %213 = vsyncadd [#allocation6], %s212
      %s214 = sshll.u32 [#allocation9], 4
      %s215 = int_to_ptr.vmem [resolvable:$true] %s214
      %220 = dma.vmem_to_hbm [thread:$0]  %s215, 256, %s3, [#allocation6], 128, 128, 8
    $region37: #{tpu_custom_call.1} parent=1 // pred_fallthru
      _
    // Predicated region
    $region38: #{tpu_custom_call.1} parent=1 // pred_check
      _
    $region39: #{tpu_custom_call.1} parent=1 // pred_check_branch
      %222 = sbr.rel (0) target = $region41
    $region40: #{tpu_custom_call.1} parent=1 // pred_region
      %223 = dma.done [#allocation6], 256
    $region41: #{tpu_custom_call.1} parent=1 // pred_fallthru
      _
    %224 = vsyncpa [#allocation5], 1
    %225 = vsyncpa [#allocation8], 1
    %226 = vsyncpa [#allocation6], 1

</llo_original>
